<compile_context>
chip_gen: v7x
topology: tpu7x:2x2x1
jax: 0.10.0
libtpu: 0.0.40
codegen_flags: <defaults>
</compile_context>

<pallas_src>
import functools

import jax
import jax.numpy as jnp
from jax.experimental import pallas as pl
from jax.experimental.pallas import tpu as pltpu


def _round_up(x, m):
    return ((x + m - 1) // m) * m


@functools.lru_cache(maxsize=None)
def _buffered_weights_supported():
    """One-time feature probe for BlockSpec(pipeline_mode=pl.Buffered(1)).

    Runs a tiny throwaway kernel; failures here only disable single-buffered
    weights, they never mask errors from the real VAE kernel.
    """
    if not hasattr(pl, "Buffered"):
        return False

    def _probe_kernel(x_ref, o_ref):
        o_ref[...] = x_ref[...]

    try:
        out = pl.pallas_call(
            _probe_kernel,
            out_shape=jax.ShapeDtypeStruct((8, 128), jnp.float32),
            grid_spec=pltpu.PrefetchScalarGridSpec(
                num_scalar_prefetch=0,
                grid=(1,),
                in_specs=[pl.BlockSpec((8, 128), lambda i: (0, 0),
                                       pipeline_mode=pl.Buffered(1))],
                out_specs=pl.BlockSpec((8, 128), lambda i: (0, 0)),
            ),
        )(jnp.zeros((8, 128), jnp.float32))
        jax.block_until_ready(out)
        return True
    except Exception:  # probe only — real kernel errors are never swallowed
        return False


def _vae_forward_kernel(
    x_ref,      # (tb, Dp)    compute dtype  (lane-padded input)
    w_xh_ref,   # (Dp, 2*Lp)  compute dtype  fused W_enc @ [W_mean | W_log_var]
    b_xh_ref,   # (1, 2*Lp)   f32            fused b_enc @ [W_mean | W_log_var]
    w_zx_ref,   # (Lp, Dp)    compute dtype  fused W_dec1 @ W_dec2
    b_zx_ref,   # (1, Dp)     f32            fused b_dec1 @ W_dec2 + b_dec2
    eps_ref,    # (tb, Lp)    f32            N(0,1) noise, padded lanes are 0
    out_ref,    # (tb, Dp + 2*Lp)            packed [x_hat | mean | log_var]
):
    lp = eps_ref.shape[-1]
    cdt = w_zx_ref.dtype

    # heads = x @ W_x2heads + b   (MXU, f32 accumulation)
    # columns are [mean | log_var], each in its own 128-aligned Lp section.
    heads = jnp.dot(x_ref[...], w_xh_ref[...],
                    preferred_element_type=jnp.float32) + b_xh_ref[...]
    mean = heads[:, :lp]          # lane-tile-aligned slices: no XLU shuffle
    log_var = heads[:, lp:]

    # reparameterization: z = mean + exp(0.5 * log_var) * eps  (f32, exp->EUP)
    z = mean + jnp.exp(0.5 * log_var) * eps_ref[...]

    # x_hat = z @ W_z2xhat + b   (MXU, f32 accumulation)
    x_hat = jnp.dot(z.astype(cdt), w_zx_ref[...],
                    preferred_element_type=jnp.float32) + b_zx_ref[...]

    # ONE full-width unmasked store of the lane-dense packed slab.
    out_ref[...] = jnp.concatenate([x_hat, heads], axis=-1).astype(out_ref.dtype)


def _build_vae_call(B_pad, Dp, Lp, P, tile_b, out_dtype,
                    single_buffer_weights, vmem_limit_bytes):
    if single_buffer_weights and _buffered_weights_supported():
        # Grid-invariant weights: one VMEM buffer instead of two (matters on
        # v7x's 64 MiB VMEM at realistic sizes).
        def weight_spec(shape):
            return pl.BlockSpec(shape, lambda i: (0, 0),
                                pipeline_mode=pl.Buffered(1))
    else:
        def weight_spec(shape):
            return pl.BlockSpec(shape, lambda i: (0, 0))

    return pl.pallas_call(
        _vae_forward_kernel,
        out_shape=jax.ShapeDtypeStruct((B_pad, P), out_dtype),
        grid_spec=pltpu.PrefetchScalarGridSpec(
            num_scalar_prefetch=0,
            grid=(B_pad // tile_b,),
            in_specs=[
                pl.BlockSpec((tile_b, Dp), lambda i: (i, 0)),   # x
                weight_spec((Dp, 2 * Lp)),                      # W_x2heads
                weight_spec((1, 2 * Lp)),                       # b_x2heads
                weight_spec((Lp, Dp)),                          # W_z2xhat
                weight_spec((1, Dp)),                           # b_z2xhat
                pl.BlockSpec((tile_b, Lp), lambda i: (i, 0)),   # eps
            ],
            out_specs=pl.BlockSpec((tile_b, P), lambda i: (i, 0)),
        ),
        compiler_params=pltpu.CompilerParams(
            dimension_semantics=("parallel",),
            vmem_limit_bytes=vmem_limit_bytes,
        ),
    )


def linear_vae_forward(x, params, eps, *, tile_b=None, max_tile_b=512,
                       compute_dtype=jnp.float32, out_dtype=jnp.float32,
                       single_buffer_weights=True,
                       vmem_limit_bytes=32 * 1024 * 1024):
    """LinearVAE forward pass as a single fused Pallas kernel.

    x:      (B, input_size) float32
    params: dict of weights stored as [in, out] (PyTorch W.T) and (1, out) biases
    eps:    (B, latent_size) float32 standard-normal noise
    compute_dtype: MXU operand dtype.  bf16 is safe on v5e/v6e/v7x (the MXU
        takes bf16 natively and all elementwise math here stays f32); it
        halves weight/activation HBM traffic on this bandwidth-bound kernel.
    out_dtype: dtype of the packed output slab (bf16 halves writeback if the
        downstream loss tolerates it).
    max_tile_b: batch-tile cap.  Raise (512-1024) on v5e/v6e (128 MiB VMEM,
        1 TC); on v7x keep it <= B_pad // 2 so the parallel batch axis can be
        sharded over both TensorCores.
    Returns (x_hat, mean, log_var).
    """
    B, D = x.shape
    L = params["w_mean"].shape[1]

    Dp = _round_up(D, 128)           # lane-aligned input / x_hat width
    Lp = _round_up(L, 128)           # lane-aligned per-head width
    P = Dp + 2 * Lp                  # per-section-aligned packed slab width

    # Batch tile: whole (padded) batch for small B, capped at max_tile_b.
    # Sub-32-bit MXU operands pack >1 row per sublane -> round rows to 16/32.
    bits = jnp.finfo(compute_dtype).bits
    sub = 32 if bits <= 8 else (16 if bits < 32 else 8)
    if tile_b is None:
        tile_b = min(_round_up(B, sub), max_tile_b)
    else:
        tile_b = _round_up(tile_b, sub)
    B_pad = _round_up(B, tile_b)

    f32 = jnp.float32
    cdt = compute_dtype

    # ---- Wrapper-side affine pre-fusion (module has no nonlinearities) ----
    # heads(x) = x @ (W_enc @ [W_mean | W_log_var]) + b_enc @ [W_mean | W_log_var]
    w_mean_p = jnp.pad(params["w_mean"].astype(f32), ((0, 0), (0, Lp - L)))
    w_lvar_p = jnp.pad(params["w_log_var"].astype(f32), ((0, 0), (0, Lp - L)))
    w_heads = jnp.concatenate([w_mean_p, w_lvar_p], axis=1)            # (H, 2Lp)
    w_xh = params["w_enc"].astype(f32) @ w_heads                       # (D, 2Lp)
    w_xh = jnp.pad(w_xh, ((0, Dp - D), (0, 0)))                        # (Dp, 2Lp)
    b_xh = params["b_enc"].astype(f32) @ w_heads                       # (1, 2Lp)

    # x_hat(z) = z @ (W_dec1 @ W_dec2) + (b_dec1 @ W_dec2 + b_dec2)
    w_d1_p = jnp.pad(params["w_dec1"].astype(f32), ((0, Lp - L), (0, 0)))  # (Lp, H)
    w_zx = w_d1_p @ params["w_dec2"].astype(f32)                       # (Lp, D)
    w_zx = jnp.pad(w_zx, ((0, 0), (0, Dp - D)))                        # (Lp, Dp)
    b_zx = (params["b_dec1"].astype(f32) @ params["w_dec2"].astype(f32)
            + params["b_dec2"].astype(f32))                            # (1, D)
    b_zx = jnp.pad(b_zx, ((0, 0), (0, Dp - D)))                        # (1, Dp)

    # Lane-/batch-pad activations (padded eps lanes are zero -> z pad rows/cols
    # contribute nothing; padded W rows/cols are zero as well).
    x_p = jnp.pad(x.astype(f32), ((0, B_pad - B), (0, Dp - D)))
    eps_p = jnp.pad(eps.astype(f32), ((0, B_pad - B), (0, Lp - L)))

    call = _build_vae_call(B_pad, Dp, Lp, P, tile_b, out_dtype,
                           single_buffer_weights, vmem_limit_bytes)
    packed = call(
        x_p.astype(cdt),
        w_xh.astype(cdt), b_xh,
        w_zx.astype(cdt), b_zx,
        eps_p,
    )

    # Unpack the per-section-aligned slab: [x_hat | mean | log_var].
    x_hat = packed[:B, :D]
    mean = packed[:B, Dp:Dp + L]
    log_var = packed[:B, Dp + Lp:Dp + Lp + L]
    return x_hat, mean, log_var


def init_params(key, input_size, hidden_size, latent_size):
    """Deterministic synthetic init. Weights stored as [in, out] (PyTorch W.T)."""
    ks = jax.random.split(key, 8)

    def lin_w(k, fan_in, fan_out):
        bound = 1.0 / jnp.sqrt(fan_in)   # torch.nn.Linear default init
        return jax.random.uniform(k, (fan_in, fan_out), jnp.float32, -bound, bound)

    def lin_b(k, fan_in, fan_out):
        bound = 1.0 / jnp.sqrt(fan_in)
        return jax.random.uniform(k, (1, fan_out), jnp.float32, -bound, bound)

    return {
        "w_enc": lin_w(ks[0], input_size, hidden_size),
        "b_enc": lin_b(ks[1], input_size, hidden_size),
        "w_mean": lin_w(ks[2], hidden_size, latent_size),
        "w_log_var": lin_w(ks[3], hidden_size, latent_size),
        "w_dec1": lin_w(ks[4], latent_size, hidden_size),
        "b_dec1": lin_b(ks[5], latent_size, hidden_size),
        "w_dec2": lin_w(ks[6], hidden_size, input_size),
        "b_dec2": lin_b(ks[7], hidden_size, input_size),
    }


def reference_forward(x, params, eps):
    """Pure-JAX reference mirroring the PyTorch module (un-fused)."""
    t = x @ params["w_enc"] + params["b_enc"]
    mean = t @ params["w_mean"]
    log_var = t @ params["w_log_var"]
    z = mean + jnp.exp(0.5 * log_var) * eps
    h = z @ params["w_dec1"] + params["b_dec1"]
    x_hat = h @ params["w_dec2"] + params["b_dec2"]
    return x_hat, mean, log_var


if __name__ == "__main__":
    input_size, hidden_size, latent_size = 64, 32, 2
    batch = 16

    key = jax.random.PRNGKey(0)
    k_param, k_x, k_eps = jax.random.split(key, 3)

    params = init_params(k_param, input_size, hidden_size, latent_size)
    x = jax.random.normal(k_x, (batch, input_size), jnp.float32)
    # epsilon drawn outside the kernel (deterministic stand-in for randn_like)
    eps = jax.random.normal(k_eps, (batch, latent_size), jnp.float32)

    x_hat_ref, mean_ref, log_var_ref = reference_forward(x, params, eps)

    # f32 MXU-operand path.  Tolerance is slightly looser than 1e-5 because
    # the wrapper pre-fuses the affine maps (f32 matmul re-association only).
    x_hat, mean, log_var = linear_vae_forward(
        x, params, eps, compute_dtype=jnp.float32)
    jax.block_until_ready((x_hat, mean, log_var))

    assert x_hat.shape == (batch, input_size)
    assert mean.shape == (batch, latent_size)
    assert log_var.shape == (batch, latent_size)
    assert jnp.allclose(x_hat, x_hat_ref, atol=1e-4, rtol=1e-4)
    assert jnp.allclose(mean, mean_ref, atol=1e-4, rtol=1e-4)
    assert jnp.allclose(log_var, log_var_ref, atol=1e-4, rtol=1e-4)

    # bf16 MXU-operand path (recommended on all generations; accumulation and
    # the reparameterization stay f32): only bf16 quantization error remains.
    x_hat_b, mean_b, log_var_b = linear_vae_forward(
        x, params, eps, compute_dtype=jnp.bfloat16)
    jax.block_until_ready((x_hat_b, mean_b, log_var_b))
    assert jnp.allclose(x_hat_b, x_hat_ref, atol=1e-1, rtol=1e-1)
    assert jnp.allclose(mean_b, mean_ref, atol=1e-1, rtol=1e-1)
    assert jnp.allclose(log_var_b, log_var_ref, atol=1e-1, rtol=1e-1)

    print("KERNEL_OK")
</pallas_src>

<mosaic_0001>
module attributes {stable_mosaic.version = 11 : i64} {
  func.func @_probe_kernel(%arg0: i32, %arg1: memref<8x128xf32, #tpu.memory_space<vmem>>, %arg2: memref<8x128xf32, #tpu.memory_space<vmem>>) attributes {dimension_semantics = [#tpu.dimension_semantics<arbitrary>], iteration_bounds = array<i64: 1>, scalar_prefetch = 0 : i64, scratch_operands = 0 : i64, tpu.core_type = #tpu.core_type<tc>, window_params = [{pipeline_mode = #tpu.pipeline_mode<synchronous>, transform_indices = @transform_0, window_bounds = array<i64: 8, 128>}, {pipeline_mode = #tpu.pipeline_mode<synchronous>, transform_indices = @transform_1, window_bounds = array<i64: 8, 128>}]} {
    %c0 = arith.constant 0 : index
    %c0_0 = arith.constant 0 : index
    %0 = vector.load %arg1[%c0, %c0_0] : memref<8x128xf32, #tpu.memory_space<vmem>>, vector<8x128xf32>
    %c0_1 = arith.constant 0 : index
    %c0_2 = arith.constant 0 : index
    %1 = vector.load %arg2[%c0_1, %c0_2] : memref<8x128xf32, #tpu.memory_space<vmem>>, vector<8x128xf32>
    tpu.vector_store %arg2[%c0_1, %c0_2], %0 {strides = array<i32>} : memref<8x128xf32, #tpu.memory_space<vmem>>, vector<8x128xf32>,
    return
  }
  func.func @transform_0(%arg0: i32) -> (i32, i32) {
    %c0_i32 = arith.constant 0 : i32
    %c0_i32_0 = arith.constant 0 : i32
    %c0_i32_1 = arith.constant 0 : i32
    return %c0_i32, %c0_i32_0 : i32, i32
  }
  func.func @transform_1(%arg0: i32) -> (i32, i32) {
    %c0_i32 = arith.constant 0 : i32
    %c0_i32_0 = arith.constant 0 : i32
    %c0_i32_1 = arith.constant 0 : i32
    return %c0_i32, %c0_i32_0 : i32, i32
  }
}

module attributes {stable_mosaic.version = 11 : i64} {
  func.func @_vae_forward_kernel(%arg0: i32, %arg1: memref<16x128xf32, #tpu.memory_space<vmem>>, %arg2: memref<128x256xf32, #tpu.memory_space<vmem>>, %arg3: memref<1x256xf32, #tpu.memory_space<vmem>>, %arg4: memref<128x128xf32, #tpu.memory_space<vmem>>, %arg5: memref<1x128xf32, #tpu.memory_space<vmem>>, %arg6: memref<16x128xf32, #tpu.memory_space<vmem>>, %arg7: memref<16x384xf32, #tpu.memory_space<vmem>>) attributes {dimension_semantics = [#tpu.dimension_semantics<parallel>], iteration_bounds = array<i64: 1>, scalar_prefetch = 0 : i64, scratch_operands = 0 : i64, tpu.core_type = #tpu.core_type<tc>, window_params = [{transform_indices = @transform_0, window_bounds = array<i64: 16, 128>}, {pipeline_mode = #tpu.pipeline_mode<synchronous>, transform_indices = @transform_1, window_bounds = array<i64: 128, 256>}, {pipeline_mode = #tpu.pipeline_mode<synchronous>, transform_indices = @transform_2, window_bounds = array<i64: 1, 256>}, {pipeline_mode = #tpu.pipeline_mode<synchronous>, transform_indices = @transform_3, window_bounds = array<i64: 128, 128>}, {pipeline_mode = #tpu.pipeline_mode<synchronous>, transform_indices = @transform_4, window_bounds = array<i64: 1, 128>}, {transform_indices = @transform_5, window_bounds = array<i64: 16, 128>}, {transform_indices = @transform_6, window_bounds = array<i64: 16, 384>}]} {
    %c0 = arith.constant 0 : index
    %c0_0 = arith.constant 0 : index
    %0 = vector.load %arg1[%c0, %c0_0] : memref<16x128xf32, #tpu.memory_space<vmem>>, vector<16x128xf32>
    %c0_1 = arith.constant 0 : index
    %c0_2 = arith.constant 0 : index
    %1 = vector.load %arg2[%c0_1, %c0_2] : memref<128x256xf32, #tpu.memory_space<vmem>>, vector<128x256xf32>
    %cst = arith.constant dense<0.000000e+00> : vector<16x256xf32>
    %2 = tpu.matmul %0, %1, %cst {dimension_numbers = #tpu.dot_dimension_numbers<[1], [0], [0], [1], [0, 0, 1, 1], [], []>} : vector<16x128xf32>, vector<128x256xf32>, vector<16x256xf32> -> vector<16x256xf32>
    %c0_3 = arith.constant 0 : index
    %c0_4 = arith.constant 0 : index
    %3 = vector.load %arg3[%c0_3, %c0_4] : memref<1x256xf32, #tpu.memory_space<vmem>>, vector<1x256xf32>
    %4 = vector.broadcast %3 : vector<1x256xf32> to vector<16x256xf32>
    %5 = arith.addf %2, %4 : vector<16x256xf32>
    %6 = vector.extract_strided_slice %5 {offsets = [0, 0], sizes = [16, 128], strides = [1, 1]} : vector<16x256xf32> to vector<16x128xf32>
    %7 = vector.extract_strided_slice %5 {offsets = [0, 128], sizes = [16, 128], strides = [1, 1]} : vector<16x256xf32> to vector<16x128xf32>
    %cst_5 = arith.constant 5.000000e-01 : f32
    %8 = vector.broadcast %cst_5 : f32 to vector<16x128xf32>
    %9 = arith.mulf %8, %7 : vector<16x128xf32>
    %10 = math.exp %9 : vector<16x128xf32>
    %c0_6 = arith.constant 0 : index
    %c0_7 = arith.constant 0 : index
    %11 = vector.load %arg6[%c0_6, %c0_7] : memref<16x128xf32, #tpu.memory_space<vmem>>, vector<16x128xf32>
    %12 = arith.mulf %10, %11 : vector<16x128xf32>
    %13 = arith.addf %6, %12 : vector<16x128xf32>
    %c0_8 = arith.constant 0 : index
    %c0_9 = arith.constant 0 : index
    %14 = vector.load %arg4[%c0_8, %c0_9] : memref<128x128xf32, #tpu.memory_space<vmem>>, vector<128x128xf32>
    %cst_10 = arith.constant dense<0.000000e+00> : vector<16x128xf32>
    %15 = tpu.matmul %13, %14, %cst_10 {dimension_numbers = #tpu.dot_dimension_numbers<[1], [0], [0], [1], [0, 0, 1, 1], [], []>} : vector<16x128xf32>, vector<128x128xf32>, vector<16x128xf32> -> vector<16x128xf32>
    %c0_11 = arith.constant 0 : index
    %c0_12 = arith.constant 0 : index
    %16 = vector.load %arg5[%c0_11, %c0_12] : memref<1x128xf32, #tpu.memory_space<vmem>>, vector<1x128xf32>
    %17 = vector.broadcast %16 : vector<1x128xf32> to vector<16x128xf32>
    %18 = arith.addf %15, %17 : vector<16x128xf32>
    %19 = tpu.concatenate %18, %5 in 1 : vector<16x128xf32>, vector<16x256xf32> -> vector<16x384xf32>
    %c0_13 = arith.constant 0 : index
    %c0_14 = arith.constant 0 : index
    %20 = vector.load %arg7[%c0_13, %c0_14] : memref<16x384xf32, #tpu.memory_space<vmem>>, vector<16x384xf32>
    tpu.vector_store %arg7[%c0_13, %c0_14], %19 {strides = array<i32>} : memref<16x384xf32, #tpu.memory_space<vmem>>, vector<16x384xf32>,
    return
  }
  func.func @transform_0(%arg0: i32) -> (i32, i32) {
    %c0_i32 = arith.constant 0 : i32
    %c0_i32_0 = arith.constant 0 : i32
    return %arg0, %c0_i32 : i32, i32
  }
  func.func @transform_1(%arg0: i32) -> (i32, i32) {
    %c0_i32 = arith.constant 0 : i32
    %c0_i32_0 = arith.constant 0 : i32
    %c0_i32_1 = arith.constant 0 : i32
    return %c0_i32, %c0_i32_0 : i32, i32
  }
  func.func @transform_2(%arg0: i32) -> (i32, i32) {
    %c0_i32 = arith.constant 0 : i32
    %c0_i32_0 = arith.constant 0 : i32
    %c0_i32_1 = arith.constant 0 : i32
    return %c0_i32, %c0_i32_0 : i32, i32
  }
  func.func @transform_3(%arg0: i32) -> (i32, i32) {
    %c0_i32 = arith.constant 0 : i32
    %c0_i32_0 = arith.constant 0 : i32
    %c0_i32_1 = arith.constant 0 : i32
    return %c0_i32, %c0_i32_0 : i32, i32
  }
  func.func @transform_4(%arg0: i32) -> (i32, i32) {
    %c0_i32 = arith.constant 0 : i32
    %c0_i32_0 = arith.constant 0 : i32
    %c0_i32_1 = arith.constant 0 : i32
    return %c0_i32, %c0_i32_0 : i32, i32
  }
  func.func @transform_5(%arg0: i32) -> (i32, i32) {
    %c0_i32 = arith.constant 0 : i32
    %c0_i32_0 = arith.constant 0 : i32
    return %arg0, %c0_i32 : i32, i32
  }
  func.func @transform_6(%arg0: i32) -> (i32, i32) {
    %c0_i32 = arith.constant 0 : i32
    %c0_i32_0 = arith.constant 0 : i32
    return %arg0, %c0_i32 : i32, i32
  }
}

</mosaic_0001>

<llo_original>
// kernel: tpu_custom_call.1
$region0: #{tpu_custom_call.1}
  #allocation0 [shape = 'u32[]', space=smem, size = 0x4, offset = 0x4, fixed_abs, tag = 'smem constant byte address 0x4 - core index']
  #allocation1 [shape = 'u32[144,128]{1,0:T(1,128)}', space=vmem, size = 0x12000, scoped, tag = 'internal scratch']
  %s0 = inlined_call_operand.hbm [shape: f32[8,128], index: 0, kind: input, shape index: {}]
  %s1 = inlined_call_operand.hbm [shape: f32[8,128], index: 1, kind: output, shape index: {}]
  %s2 = sld [smem:[#allocation0]]
  $region18: #{tpu_custom_call.1} parent=0
    _
  %s4 = ssub.s32 1, %s2
  %s5 = scalar_select 0, %s4, %s2
  $region1: #{tpu_custom_call.1} parent=0
    #allocation2 [shape = 'u8[4096]{0}', space=vmem, size = 0x1000, scoped, tag = 'input window, operand 0, single buffered']
    #allocation3 [shape = 's32[1]{0}', space=sflag, size = 0x4, scoped, tag = 'scoped memory for tpu_custom_call.1']
    #allocation4 [shape = 's32[1]{0}', space=sflag, size = 0x4, scoped, tag = 'scoped memory for tpu_custom_call.1']
    #allocation5 [shape = 'u8[4096]{0}', space=vmem, size = 0x1000, scoped, tag = 'output window, operand 0, single buffered']
    %6 = vsyncpa [#allocation3], 0
    %7 = vsyncpa [#allocation4], 0
    // Predicated region
    $region2: #{tpu_custom_call.1} parent=1 // pred_check
      _
    $region3: #{tpu_custom_call.1} parent=1 // pred_check_branch
      %9 = sbr.rel (0) target = $region5
    $region4: #{tpu_custom_call.1} parent=1 // pred_region
      %s11 = ssub.s32 128, 128
      %12 = vsyncadd [#allocation3], %s11
      %s14 = sshll.u32 [#allocation2], 4
      %s15 = int_to_ptr.vmem [resolvable:$true] %s14
      %17 = dma.hbm_to_vmem [thread:$0]  %s0, 128, %s15, [#allocation3]
    $region5: #{tpu_custom_call.1} parent=1 // pred_fallthru
      _
    // Predicated region
    $region6: #{tpu_custom_call.1} parent=1 // pred_check
      _
    $region7: #{tpu_custom_call.1} parent=1 // pred_check_branch
      %19 = sbr.rel (0) target = $region9
    $region8: #{tpu_custom_call.1} parent=1 // pred_region
      %20 = dma.done [#allocation3], 128
    $region9: #{tpu_custom_call.1} parent=1 // pred_fallthru
      _
    %v21 = vld [vmem:[#allocation2] sm:$0xff]
    %22 = vst [vmem:[#allocation5] sm:$0xff] %v21
    // Predicated region
    $region10: #{tpu_custom_call.1} parent=1 // pred_check
      _
    $region11: #{tpu_custom_call.1} parent=1 // pred_check_branch
      %24 = sbr.rel (0) target = $region13
    $region12: #{tpu_custom_call.1} parent=1 // pred_region
      %s26 = ssub.s32 128, 128
      %27 = vsyncadd [#allocation4], %s26
      %s29 = sshll.u32 [#allocation5], 4
      %s30 = int_to_ptr.vmem [resolvable:$true] %s29
      %32 = dma.vmem_to_hbm [thread:$0]  %s30, 128, %s1, [#allocation4]
    $region13: #{tpu_custom_call.1} parent=1 // pred_fallthru
      _
    // Predicated region
    $region14: #{tpu_custom_call.1} parent=1 // pred_check
      _
    $region15: #{tpu_custom_call.1} parent=1 // pred_check_branch
      %34 = sbr.rel (0) target = $region17
    $region16: #{tpu_custom_call.1} parent=1 // pred_region
      %35 = dma.done [#allocation4], 128
    $region17: #{tpu_custom_call.1} parent=1 // pred_fallthru
      _
    %36 = vsyncpa [#allocation3], 1
    %37 = vsyncpa [#allocation4], 1

// kernel: tpu_custom_call.1
$region0: #{tpu_custom_call.1}
  #allocation0 [shape = 'u32[]', space=smem, size = 0x4, offset = 0x4, fixed_abs, tag = 'smem constant byte address 0x4 - core index']
  #allocation1 [shape = 'u32[144,128]{1,0:T(1,128)}', space=vmem, size = 0x12000, scoped, tag = 'internal scratch']
  %s0 = inlined_call_operand.hbm [shape: f32[16,128], index: 0, kind: input, shape index: {}]
  %s1 = inlined_call_operand.hbm [shape: f32[128,256], index: 1, kind: input, shape index: {}]
  %s2 = inlined_call_operand.vmem [shape: f32[1,256], index: 2, kind: input, shape index: {}]
  %s3 = inlined_call_operand.hbm [shape: f32[128,128], index: 3, kind: input, shape index: {}]
  %s4 = inlined_call_operand.hbm [shape: f32[1,128], index: 4, kind: input, shape index: {}]
  %s5 = inlined_call_operand.vmem [shape: f32[16,128], index: 5, kind: input, shape index: {}]
  %s6 = inlined_call_operand.hbm [shape: f32[16,384], index: 6, kind: output, shape index: {}]
  %s7 = sld [smem:[#allocation0]]
  $region50: #{tpu_custom_call.1} parent=0
    _
  %s9 = ssub.s32 1, %s7
  %s10 = scalar_select 0, %s9, %s7
  $region1: #{tpu_custom_call.1} parent=0
    #allocation2 [shape = 'u8[8192]{0}', space=vmem, size = 0x2000, scoped, tag = 'input window, operand 0, single buffered']
    #allocation3 [shape = 's32[1]{0}', space=sflag, size = 0x4, scoped, tag = 'scoped memory for tpu_custom_call.1']
    #allocation4 [shape = 's32[1]{0}', space=sflag, size = 0x4, scoped, tag = 'scoped memory for tpu_custom_call.1']
    #allocation5 [shape = 'u8[131072]{0}', space=vmem, size = 0x20000, scoped, tag = 'input window, operand 1, single buffered']
    #allocation6 [shape = 's32[1]{0}', space=sflag, size = 0x4, scoped, tag = 'scoped memory for tpu_custom_call.1']
    #allocation7 [shape = 'u8[65536]{0}', space=vmem, size = 0x10000, scoped, tag = 'input window, operand 3, single buffered']
    #allocation8 [shape = 'u8[512]{0}', space=vmem, size = 0x400, scoped, tag = 'input window, operand 4, single buffered']
    #allocation9 [shape = 's32[1]{0}', space=sflag, size = 0x4, scoped, tag = 'scoped memory for tpu_custom_call.1']
    #allocation10 [shape = 'u8[24576]{0}', space=vmem, size = 0x6000, scoped, tag = 'output window, operand 0, single buffered']
    %11 = vsyncpa [#allocation3], 0
    %12 = vsyncpa [#allocation6], 0
    %13 = vsyncpa [#allocation9], 0
    %14 = vsyncpa [#allocation4], 0
    // Predicated region
    $region2: #{tpu_custom_call.1} parent=1 // pred_check
      _
    $region3: #{tpu_custom_call.1} parent=1 // pred_check_branch
      %16 = sbr.rel (0) target = $region5
    $region4: #{tpu_custom_call.1} parent=1 // pred_region
      %s18 = ssub.s32 256, 256
      %19 = vsyncadd [#allocation3], %s18
      %s20 = sshll.u32 [#allocation2], 4
      %s21 = int_to_ptr.vmem [resolvable:$true] %s20
      %26 = dma.hbm_to_vmem [thread:$0]  %s0, 256, %s21, [#allocation3], 128, 128, 8
    $region5: #{tpu_custom_call.1} parent=1 // pred_fallthru
      _
    // Predicated region
    $region6: #{tpu_custom_call.1} parent=1 // pred_check
      _
    $region7: #{tpu_custom_call.1} parent=1 // pred_check_branch
      %28 = sbr.rel (0) target = $region9
    $region8: #{tpu_custom_call.1} parent=1 // pred_region
      %s30 = ssub.s32 4096, 4096
      %31 = vsyncadd [#allocation6], %s30
      %s32 = sshll.u32 [#allocation5], 4
      %s33 = int_to_ptr.vmem [resolvable:$true] %s32
      %38 = dma.hbm_to_vmem [thread:$0]  %s1, 4096, %s33, [#allocation6], 256, 256, 16
    $region9: #{tpu_custom_call.1} parent=1 // pred_fallthru
      _
    // Predicated region
    $region10: #{tpu_custom_call.1} parent=1 // pred_check
      _
    $region11: #{tpu_custom_call.1} parent=1 // pred_check_branch
      %40 = sbr.rel (0) target = $region13
    $region12: #{tpu_custom_call.1} parent=1 // pred_region
      _
    $region13: #{tpu_custom_call.1} parent=1 // pred_fallthru
      _
    // Predicated region
    $region14: #{tpu_custom_call.1} parent=1 // pred_check
      _
    $region15: #{tpu_custom_call.1} parent=1 // pred_check_branch
      %42 = sbr.rel (0) target = $region17
    $region16: #{tpu_custom_call.1} parent=1 // pred_region
      %s44 = ssub.s32 2048, 2048
      %45 = vsyncadd [#allocation6], %s44
      %s46 = sshll.u32 [#allocation7], 4
      %s47 = int_to_ptr.vmem [resolvable:$true] %s46
      %52 = dma.hbm_to_vmem [thread:$0]  %s3, 2048, %s47, [#allocation6], 128, 128, 8
    $region17: #{tpu_custom_call.1} parent=1 // pred_fallthru
      _
    // Predicated region
    $region18: #{tpu_custom_call.1} parent=1 // pred_check
      _
    $region19: #{tpu_custom_call.1} parent=1 // pred_check_branch
      %54 = sbr.rel (0) target = $region21
    $region20: #{tpu_custom_call.1} parent=1 // pred_region
      %s56 = ssub.s32 16, 16
      %57 = vsyncadd [#allocation9], %s56
      %s59 = sshll.u32 [#allocation8], 4
      %s60 = int_to_ptr.vmem [resolvable:$true] %s59
      %62 = dma.hbm_to_vmem [thread:$0]  %s4, 16, %s60, [#allocation9]
    $region21: #{tpu_custom_call.1} parent=1 // pred_fallthru
      _
    // Predicated region
    $region22: #{tpu_custom_call.1} parent=1 // pred_check
      _
    $region23: #{tpu_custom_call.1} parent=1 // pred_check_branch
      %64 = sbr.rel (0) target = $region25
    $region24: #{tpu_custom_call.1} parent=1 // pred_region
      _
    $region25: #{tpu_custom_call.1} parent=1 // pred_fallthru
      _
    // Predicated region
    $region26: #{tpu_custom_call.1} parent=1 // pred_check
      _
    $region27: #{tpu_custom_call.1} parent=1 // pred_check_branch
      %66 = sbr.rel (0) target = $region29
    $region28: #{tpu_custom_call.1} parent=1 // pred_region
      %67 = dma.done [#allocation3], 256
    $region29: #{tpu_custom_call.1} parent=1 // pred_fallthru
      _
    // Predicated region
    $region30: #{tpu_custom_call.1} parent=1 // pred_check
      _
    $region31: #{tpu_custom_call.1} parent=1 // pred_check_branch
      %69 = sbr.rel (0) target = $region33
    $region32: #{tpu_custom_call.1} parent=1 // pred_region
      %70 = dma.done [#allocation6], 4096
    $region33: #{tpu_custom_call.1} parent=1 // pred_fallthru
      _
    // Predicated region
    $region34: #{tpu_custom_call.1} parent=1 // pred_check
      _
    $region35: #{tpu_custom_call.1} parent=1 // pred_check_branch
      %72 = sbr.rel (0) target = $region37
    $region36: #{tpu_custom_call.1} parent=1 // pred_region
      %73 = dma.done [#allocation6], 2048
    $region37: #{tpu_custom_call.1} parent=1 // pred_fallthru
      _
    // Predicated region
    $region38: #{tpu_custom_call.1} parent=1 // pred_check
      _
    $region39: #{tpu_custom_call.1} parent=1 // pred_check_branch
      %75 = sbr.rel (0) target = $region41
    $region40: #{tpu_custom_call.1} parent=1 // pred_region
      %76 = dma.done [#allocation9], 16
    $region41: #{tpu_custom_call.1} parent=1 // pred_fallthru
      _
    %v77 = vld [vmem:[#allocation2] sm:$0xff]
    %v78 = vld [vmem:[#allocation2 + $0x8] sm:$0xff]
    %v79 = vld [vmem:[#allocation5] sm:$0xff]
    %v80 = vld [vmem:[#allocation5 + $0x8] sm:$0xff]
    %v81 = vld [vmem:[#allocation5 + $0x10] sm:$0xff]
    %v82 = vld [vmem:[#allocation5 + $0x18] sm:$0xff]
    %v83 = vld [vmem:[#allocation5 + $0x20] sm:$0xff]
    %v84 = vld [vmem:[#allocation5 + $0x28] sm:$0xff]
    %v85 = vld [vmem:[#allocation5 + $0x30] sm:$0xff]
    %v86 = vld [vmem:[#allocation5 + $0x38] sm:$0xff]
    %v87 = vld [vmem:[#allocation5 + $0x40] sm:$0xff]
    %v88 = vld [vmem:[#allocation5 + $0x48] sm:$0xff]
    %v89 = vld [vmem:[#allocation5 + $0x50] sm:$0xff]
    %v90 = vld [vmem:[#allocation5 + $0x58] sm:$0xff]
    %v91 = vld [vmem:[#allocation5 + $0x60] sm:$0xff]
    %v92 = vld [vmem:[#allocation5 + $0x68] sm:$0xff]
    %v93 = vld [vmem:[#allocation5 + $0x70] sm:$0xff]
    %v94 = vld [vmem:[#allocation5 + $0x78] sm:$0xff]
    %v95 = vld [vmem:[#allocation5 + $0x80] sm:$0xff]
    %v96 = vld [vmem:[#allocation5 + $0x88] sm:$0xff]
    %v97 = vld [vmem:[#allocation5 + $0x90] sm:$0xff]
    %v98 = vld [vmem:[#allocation5 + $0x98] sm:$0xff]
    %v99 = vld [vmem:[#allocation5 + $0xa0] sm:$0xff]
    %v100 = vld [vmem:[#allocation5 + $0xa8] sm:$0xff]
    %v101 = vld [vmem:[#allocation5 + $0xb0] sm:$0xff]
    %v102 = vld [vmem:[#allocation5 + $0xb8] sm:$0xff]
    %v103 = vld [vmem:[#allocation5 + $0xc0] sm:$0xff]
    %v104 = vld [vmem:[#allocation5 + $0xc8] sm:$0xff]
    %v105 = vld [vmem:[#allocation5 + $0xd0] sm:$0xff]
    %v106 = vld [vmem:[#allocation5 + $0xd8] sm:$0xff]
    %v107 = vld [vmem:[#allocation5 + $0xe0] sm:$0xff]
    %v108 = vld [vmem:[#allocation5 + $0xe8] sm:$0xff]
    %v109 = vld [vmem:[#allocation5 + $0xf0] sm:$0xff]
    %v110 = vld [vmem:[#allocation5 + $0xf8] sm:$0xff]
    %v111 = vld [vmem:[%s2] sm:$0x3]
    %v113 = vlaneseq
    %v114 = vshrl.u32 %v113, 7
    %v115 = vsub.s32 0, %v114
    %v116 = vrot.slane %v111, %v115
    %v117 = vlaneseq
    %v118 = vshrl.u32 %v117, 7
    %v119 = vsub.s32 1, %v118
    %v120 = vrot.slane %v111, %v119
    %123 = vmatprep.subr.mxu0 %v80
    %124 = vmatpush1.msra.mxu0 %v79
    %125 = vmatprep.subr.mxu0 %v82
    %126 = vmatpush1.msra.mxu0 %v81
    %127 = vmatprep.subr.mxu0 %v84
    %128 = vmatpush1.msra.mxu0 %v83
    %129 = vmatprep.subr.mxu0 %v86
    %130 = vmatpush1.msra.mxu0 %v85
    %131 = vmatprep.subr.mxu0 %v88
    %132 = vmatpush1.msra.mxu0 %v87
    %133 = vmatprep.subr.mxu0 %v90
    %134 = vmatpush1.msra.mxu0 %v89
    %135 = vmatprep.subr.mxu0 %v92
    %136 = vmatpush1.msra.mxu0 %v91
    %137 = vmatprep.subr.mxu0 %v94
    %138 = vmatpush1.msra.mxu0 %v93
    %139 = vmatprep.subr.mxu0 %v96
    %140 = vmatpush1.msra.mxu0 %v95
    %141 = vmatprep.subr.mxu0 %v98
    %142 = vmatpush1.msra.mxu0 %v97
    %143 = vmatprep.subr.mxu0 %v100
    %144 = vmatpush1.msra.mxu0 %v99
    %145 = vmatprep.subr.mxu0 %v102
    %146 = vmatpush1.msra.mxu0 %v101
    %147 = vmatprep.subr.mxu0 %v104
    %148 = vmatpush1.msra.mxu0 %v103
    %149 = vmatprep.subr.mxu0 %v106
    %150 = vmatpush1.msra.mxu0 %v105
    %151 = vmatprep.subr.mxu0 %v108
    %152 = vmatpush1.msra.mxu0 %v107
    %153 = vmatprep.subr.mxu0 %v110
    %154 = vmatpush1.msra.mxu0 %v109
    %155 = vmatprep.subr.mxu0 0.0
    %156 = vmatpush1.msra.mxu0 0.0
    %157 = vmatprep.subr.mxu0 0.0
    %158 = vmatpush1.msra.mxu0 0.0
    %159 = vmatprep.subr.mxu0 0.0
    %160 = vmatpush1.msra.mxu0 0.0
    %161 = vmatprep.subr.mxu0 0.0
    %162 = vmatpush1.msra.mxu0 0.0
    %163 = vmatprep.subr.mxu0 0.0
    %164 = vmatpush1.msra.mxu0 0.0
    %165 = vmatprep.subr.mxu0 0.0
    %166 = vmatpush1.msra.mxu0 0.0
    %167 = vmatprep.subr.mxu0 0.0
    %168 = vmatpush1.msra.mxu0 0.0
    %169 = vmatprep.subr.mxu0 0.0
    %170 = vmatpush1.msra.mxu0 0.0
    %171 = vmatprep.subr.mxu0 0.0
    %172 = vmatpush1.msra.mxu0 0.0
    %173 = vmatprep.subr.mxu0 0.0
    %174 = vmatpush1.msra.mxu0 0.0
    %175 = vmatprep.subr.mxu0 0.0
    %176 = vmatpush1.msra.mxu0 0.0
    %177 = vmatprep.subr.mxu0 0.0
    %178 = vmatpush1.msra.mxu0 0.0
    %179 = vmatprep.subr.mxu0 0.0
    %180 = vmatpush1.msra.mxu0 0.0
    %181 = vmatprep.subr.mxu0 0.0
    %182 = vmatpush1.msra.mxu0 0.0
    %183 = vmatprep.subr.mxu0 0.0
    %184 = vmatpush1.msra.mxu0 0.0
    %185 = vmatprep.subr.mxu0 0.0
    %186 = vmatpush1.msra.mxu0 0.0
    %187 = vmatprep.mubr.f32.mxu0 0.0
    %188 = vmatmul.mubr.f32.gmra.mrb[0].mxu0 %v77
    %v189 = vpop.f32.mrb[0].mxu0
    %v190 = vadd.f32 %v116, %v189
    %v191 = vpop.f32.mrb[0].mxu0
    %v192 = vadd.f32 %v120, %v191
    %193 = vmatprep.mubr.f32.mxu0 0.0
    %194 = vmatmul.mubr.f32.gmra.mrb[0].mxu0 %v78
    %v195 = vpop.f32.mrb[0].mxu0
    %v196 = vadd.f32 %v116, %v195
    %v197 = vpop.f32.mrb[0].mxu0
    %v198 = vadd.f32 %v120, %v197
    %199 = vdwg.mxu0
    %v200 = vmul.f32 %v192, 0.5
    %v201 = vmul.f32 %v198, 0.5
    %v202 = vmul.f32 %v200, 1.442695
    %v203 = vpow.pop %v202
    %v204 = vmul.f32 %v201, 1.442695
    %v205 = vpow.pop %v204
    %v206 = vld [vmem:[%s5] sm:$0xff]
    %v207 = vld [vmem:[%s5 + $0x8] sm:$0xff]
    %v208 = vmul.f32 %v203, %v206
    %v209 = vmul.f32 %v205, %v207
    %v210 = vadd.f32 %v190, %v208
    %v211 = vadd.f32 %v196, %v209
    %v212 = vld [vmem:[#allocation7] sm:$0xff]
    %v213 = vld [vmem:[#allocation7 + $0x8] sm:$0xff]
    %v214 = vld [vmem:[#allocation7 + $0x10] sm:$0xff]
    %v215 = vld [vmem:[#allocation7 + $0x18] sm:$0xff]
    %v216 = vld [vmem:[#allocation7 + $0x20] sm:$0xff]
    %v217 = vld [vmem:[#allocation7 + $0x28] sm:$0xff]
    %v218 = vld [vmem:[#allocation7 + $0x30] sm:$0xff]
    %v219 = vld [vmem:[#allocation7 + $0x38] sm:$0xff]
    %v220 = vld [vmem:[#allocation7 + $0x40] sm:$0xff]
    %v221 = vld [vmem:[#allocation7 + $0x48] sm:$0xff]
    %v222 = vld [vmem:[#allocation7 + $0x50] sm:$0xff]
    %v223 = vld [vmem:[#allocation7 + $0x58] sm:$0xff]
    %v224 = vld [vmem:[#allocation7 + $0x60] sm:$0xff]
    %v225 = vld [vmem:[#allocation7 + $0x68] sm:$0xff]
    %v226 = vld [vmem:[#allocation7 + $0x70] sm:$0xff]
    %v227 = vld [vmem:[#allocation7 + $0x78] sm:$0xff]
    %v228 = vld [vmem:[#allocation8] sm:$0x1]
    %v230 = vlaneseq
    %v231 = vshrl.u32 %v230, 7
    %v232 = vsub.s32 0, %v231
    %v233 = vrot.slane %v228, %v232
    %235 = vmatprep.subr.mxu0 0.0
    %236 = vmatpush1.msra.mxu0 %v212
    %237 = vmatprep.subr.mxu0 0.0
    %238 = vmatpush1.msra.mxu0 %v213
    %239 = vmatprep.subr.mxu0 0.0
    %240 = vmatpush1.msra.mxu0 %v214
    %241 = vmatprep.subr.mxu0 0.0
    %242 = vmatpush1.msra.mxu0 %v215
    %243 = vmatprep.subr.mxu0 0.0
    %244 = vmatpush1.msra.mxu0 %v216
    %245 = vmatprep.subr.mxu0 0.0
    %246 = vmatpush1.msra.mxu0 %v217
    %247 = vmatprep.subr.mxu0 0.0
    %248 = vmatpush1.msra.mxu0 %v218
    %249 = vmatprep.subr.mxu0 0.0
    %250 = vmatpush1.msra.mxu0 %v219
    %251 = vmatprep.subr.mxu0 0.0
    %252 = vmatpush1.msra.mxu0 %v220
    %253 = vmatprep.subr.mxu0 0.0
    %254 = vmatpush1.msra.mxu0 %v221
    %255 = vmatprep.subr.mxu0 0.0
    %256 = vmatpush1.msra.mxu0 %v222
    %257 = vmatprep.subr.mxu0 0.0
    %258 = vmatpush1.msra.mxu0 %v223
    %259 = vmatprep.subr.mxu0 0.0
    %260 = vmatpush1.msra.mxu0 %v224
    %261 = vmatprep.subr.mxu0 0.0
    %262 = vmatpush1.msra.mxu0 %v225
    %263 = vmatprep.subr.mxu0 0.0
    %264 = vmatpush1.msra.mxu0 %v226
    %265 = vmatprep.subr.mxu0 0.0
    %266 = vmatpush1.msra.mxu0 %v227
    %267 = vmatprep.subr.mxu0 0.0
    %268 = vmatpush1.msra.mxu0 0.0
    %269 = vmatprep.subr.mxu0 0.0
    %270 = vmatpush1.msra.mxu0 0.0
    %271 = vmatprep.subr.mxu0 0.0
    %272 = vmatpush1.msra.mxu0 0.0
    %273 = vmatprep.subr.mxu0 0.0
    %274 = vmatpush1.msra.mxu0 0.0
    %275 = vmatprep.subr.mxu0 0.0
    %276 = vmatpush1.msra.mxu0 0.0
    %277 = vmatprep.subr.mxu0 0.0
    %278 = vmatpush1.msra.mxu0 0.0
    %279 = vmatprep.subr.mxu0 0.0
    %280 = vmatpush1.msra.mxu0 0.0
    %281 = vmatprep.subr.mxu0 0.0
    %282 = vmatpush1.msra.mxu0 0.0
    %283 = vmatprep.subr.mxu0 0.0
    %284 = vmatpush1.msra.mxu0 0.0
    %285 = vmatprep.subr.mxu0 0.0
    %286 = vmatpush1.msra.mxu0 0.0
    %287 = vmatprep.subr.mxu0 0.0
    %288 = vmatpush1.msra.mxu0 0.0
    %289 = vmatprep.subr.mxu0 0.0
    %290 = vmatpush1.msra.mxu0 0.0
    %291 = vmatprep.subr.mxu0 0.0
    %292 = vmatpush1.msra.mxu0 0.0
    %293 = vmatprep.subr.mxu0 0.0
    %294 = vmatpush1.msra.mxu0 0.0
    %295 = vmatprep.subr.mxu0 0.0
    %296 = vmatpush1.msra.mxu0 0.0
    %297 = vmatprep.subr.mxu0 0.0
    %298 = vmatpush1.msra.mxu0 0.0
    %299 = vmatprep.mubr.f32.mxu0 0.0
    %300 = vmatmul.mubr.f32.gmra.mrb[0].mxu0 %v210
    %v301 = vpop.f32.mrb[0].mxu0
    %v302 = vadd.f32 %v233, %v301
    %v303 = vpop.f32.mrb[0].mxu0
    %304 = vmatprep.mubr.f32.mxu0 0.0
    %305 = vmatmul.mubr.f32.gmra.mrb[0].mxu0 %v211
    %v306 = vpop.f32.mrb[0].mxu0
    %v307 = vadd.f32 %v233, %v306
    %v308 = vpop.f32.mrb[0].mxu0
    %309 = vdwg.mxu0
    %310 = vst [vmem:[#allocation10] sm:$0xff] %v302
    %311 = vst [vmem:[#allocation10 + $0x8] sm:$0xff] %v190
    %312 = vst [vmem:[#allocation10 + $0x10] sm:$0xff] %v192
    %313 = vst [vmem:[#allocation10 + $0x18] sm:$0xff] %v307
    %314 = vst [vmem:[#allocation10 + $0x20] sm:$0xff] %v196
    %315 = vst [vmem:[#allocation10 + $0x28] sm:$0xff] %v198
    // Predicated region
    $region42: #{tpu_custom_call.1} parent=1 // pred_check
      _
    $region43: #{tpu_custom_call.1} parent=1 // pred_check_branch
      %317 = sbr.rel (0) target = $region45
    $region44: #{tpu_custom_call.1} parent=1 // pred_region
      %s319 = ssub.s32 768, 768
      %320 = vsyncadd [#allocation4], %s319
      %s321 = sshll.u32 [#allocation10], 4
      %s322 = int_to_ptr.vmem [resolvable:$true] %s321
      %327 = dma.vmem_to_hbm [thread:$0]  %s322, 768, %s6, [#allocation4], 384, 384, 24
    $region45: #{tpu_custom_call.1} parent=1 // pred_fallthru
      _
    // Predicated region
    $region46: #{tpu_custom_call.1} parent=1 // pred_check
      _
    $region47: #{tpu_custom_call.1} parent=1 // pred_check_branch
      %329 = sbr.rel (0) target = $region49
    $region48: #{tpu_custom_call.1} parent=1 // pred_region
      %330 = dma.done [#allocation4], 768
    $region49: #{tpu_custom_call.1} parent=1 // pred_fallthru
      _
    %331 = vsyncpa [#allocation3], 1
    %332 = vsyncpa [#allocation6], 1
    %333 = vsyncpa [#allocation9], 1
    %334 = vsyncpa [#allocation4], 1

</llo_original>
